<compile_context>
chip_gen: v5e
topology: v5e:2x2
jax: 0.10.0
libtpu: 0.0.40
codegen_flags: <defaults>
</compile_context>

<pallas_src>
import functools
from typing import NamedTuple

import jax
import jax.numpy as jnp
from jax.experimental import pallas as pl
from jax.experimental.pallas import tpu as pltpu


# ---------------------------------------------------------------------------
# Kernel
# ---------------------------------------------------------------------------
def _make_mlp_kernel(n_layers):
    """Fused n-layer MLP: matmul + bias (+ ReLU, except last layer)."""

    def kernel(*refs):
        x_ref, o_ref = refs[0], refs[-1]
        wb_refs = refs[1:-1]
        h = x_ref[...]
        for i in range(n_layers):
            w_ref, b_ref = wb_refs[2 * i], wb_refs[2 * i + 1]
            # Cast to the weight dtype (no-op for f32, bf16 MXU fast path for
            # bf16 weights); accumulate in f32, bias/ReLU in f32.
            h = jnp.dot(h.astype(w_ref.dtype), w_ref[...],
                        preferred_element_type=jnp.float32) + b_ref[...]
            if i < n_layers - 1:          # activation_last_layer=False
                h = jnp.maximum(h, 0.0)
        o_ref[...] = h.astype(o_ref.dtype)

    return kernel


# ---------------------------------------------------------------------------
# Host-side prep (run once, outside the per-call hot path)
# ---------------------------------------------------------------------------
def _round_up(n, m):
    return ((n + m - 1) // m) * m


def _pad_to(arr, shape):
    pads = [(0, s - d) for d, s in zip(arr.shape, shape)]
    if all(p == (0, 0) for p in pads):
        return arr
    return jnp.pad(arr, pads)


class PreparedMLP(NamedTuple):
    params: tuple   # ((W1,b1), (W2,b2), ...) padded / cast device arrays
    out_dim: int    # original (unpadded) output feature count


def prepare_mlp_params(params, matmul_dtype=jnp.float32):
    """Pad hidden/output feature dims to multiples of 128 and cast weights to
    the MXU input dtype.  Biases stay f32 (bias-add/ReLU are done in f32).
    in_dim (x's contraction dim of layer 1) is deliberately not padded."""
    padded = []
    prev_p = params[0][0].shape[0]                    # in_dim, unpadded
    for w, b in params:
        fan_out = w.shape[1]
        out_p = _round_up(fan_out, 128)
        w_p = _pad_to(jnp.asarray(w, matmul_dtype), (prev_p, out_p))
        b_p = _pad_to(jnp.asarray(b, jnp.float32).reshape(1, -1), (1, out_p))
        padded.append((w_p, b_p))
        prev_p = out_p
    return PreparedMLP(tuple(padded), params[-1][0].shape[1])


def _choose_batch_tile(batch, block_m):
    """Pick (tm, padded_batch, n_steps): even step count (balances v7x's two
    TensorCores on the 'parallel' axis) with minimal batch padding."""
    block_m = max(8, (block_m // 8) * 8)
    tm_cap = min(block_m, _round_up(batch, 8))
    n_steps = -(-batch // tm_cap)                      # cdiv
    if n_steps > 1 and n_steps % 2 == 1:
        n_steps += 1
    tm = _round_up(-(-batch // n_steps), 8)
    return tm, tm * n_steps, n_steps


# ---------------------------------------------------------------------------
# Forward
# ---------------------------------------------------------------------------
@functools.partial(jax.jit,
                   static_argnames=("out_dim", "block_m", "weight_buffers"))
def _mlp_forward_padded(x, padded_params, *, out_dim, block_m, weight_buffers):
    batch, in_dim = x.shape
    n_layers = len(padded_params)
    out_p = padded_params[-1][0].shape[1]
    w_dtype = padded_params[0][0].dtype

    # bf16 fast path: feed the MXU bf16 on both sides (also halves x DMA bytes).
    if x.dtype != w_dtype:
        x = x.astype(w_dtype)

    tm, b_pad, n_steps = _choose_batch_tile(batch, block_m)
    if b_pad != batch:
        x = jnp.pad(x, ((0, b_pad - batch), (0, 0)))

    # Resident operands: constant block index -> DMA'd once, live in VMEM.
    if weight_buffers is None:
        def resident(shape):
            return pl.BlockSpec(shape, lambda i: (0, 0))
    else:
        def resident(shape):
            return pl.BlockSpec(shape, lambda i: (0, 0),
                                pipeline_mode=pl.Buffered(weight_buffers))

    in_specs = [pl.BlockSpec((tm, in_dim), lambda i: (i, 0))]
    operands = [x]
    resident_bytes = 0
    max_hidden_p = 0
    nbuf = 2 if weight_buffers is None else weight_buffers
    for w_p, b_p in padded_params:
        in_specs += [resident(w_p.shape), resident(b_p.shape)]
        operands += [w_p, b_p]
        resident_bytes += nbuf * (w_p.size * w_p.dtype.itemsize +
                                  b_p.size * b_p.dtype.itemsize)
        max_hidden_p = max(max_hidden_p, w_p.shape[1])

    # VMEM budget: resident weights + double-buffered x/out tiles + f32
    # intermediate-activation scratch (the hidden tile far exceeds the vreg
    # file and lives in VMEM).  Clamp to v7x's 64 MiB physical VMEM; never
    # lower below the 32 MiB scoped default.
    stream_bytes = 2 * tm * (in_dim * x.dtype.itemsize + out_p * 4)
    scratch_bytes = 2 * tm * max_hidden_p * 4
    need = resident_bytes + stream_bytes + scratch_bytes
    vmem_limit = int(min(64 << 20, max(32 << 20, 2 * need + (8 << 20))))

    out = pl.pallas_call(
        _make_mlp_kernel(n_layers),
        out_shape=jax.ShapeDtypeStruct((b_pad, out_p), jnp.float32),
        grid=(n_steps,),
        in_specs=in_specs,
        out_specs=pl.BlockSpec((tm, out_p), lambda i: (i, 0)),
        compiler_params=pltpu.CompilerParams(
            dimension_semantics=("parallel",),   # batch sharded across TCs (v7x)
            vmem_limit_bytes=vmem_limit),
    )(*operands)

    # strip batch padding and the zero-padded output columns
    return out[:batch, :out_dim]


_WEIGHT_BUFFERS = 1   # set to None (default double-buffering) if Buffered(1) is rejected


def mlp_forward(x, prepared, *, block_m=512):
    """Fused MLP forward.  `prepared` comes from prepare_mlp_params()."""
    global _WEIGHT_BUFFERS
    try:
        return _mlp_forward_padded(x, prepared.params, out_dim=prepared.out_dim,
                                   block_m=block_m,
                                   weight_buffers=_WEIGHT_BUFFERS)
    except Exception:
        if _WEIGHT_BUFFERS is None:
            raise
        # pl.Buffered(1) not supported on this jax build -> default buffering.
        _WEIGHT_BUFFERS = None
        return _mlp_forward_padded(x, prepared.params, out_dim=prepared.out_dim,
                                   block_m=block_m, weight_buffers=None)


# ---------------------------------------------------------------------------
# Init + reference (pure JAX)
# ---------------------------------------------------------------------------
def init_mlp_params(key, input_dims, output_dims, hidden_dims=(32, 32)):
    """Mirror torch.nn.Linear default init: U(-1/sqrt(fan_in), 1/sqrt(fan_in))."""
    dims = [input_dims] + list(hidden_dims) + [output_dims]
    params = []
    for i in range(len(dims) - 1):
        fan_in, fan_out = dims[i], dims[i + 1]
        key, kw, kb = jax.random.split(key, 3)
        bound = 1.0 / jnp.sqrt(fan_in)
        w = jax.random.uniform(kw, (fan_in, fan_out), jnp.float32, -bound, bound)
        b = jax.random.uniform(kb, (1, fan_out), jnp.float32, -bound, bound)
        params.append((w, b))
    return params


def mlp_reference(x, params):
    n = len(params)
    h = x
    for i, (w, b) in enumerate(params):
        h = jnp.dot(h, w, precision=jax.lax.Precision.HIGHEST) + b
        if i < n - 1:  # activation_last_layer=False
            h = jnp.maximum(h, 0.0)
    return h


# ---------------------------------------------------------------------------
# Test
# ---------------------------------------------------------------------------
if __name__ == "__main__":
    key = jax.random.PRNGKey(0)

    # --- case 1: module defaults (tiny) ------------------------------------
    key, kx, kp = jax.random.split(key, 3)
    batch, input_dims, output_dims, hidden_dims = 2, 16, 8, (32, 32)
    x = jax.random.normal(kx, (batch, input_dims), jnp.float32)
    params = init_mlp_params(kp, input_dims, output_dims, hidden_dims)
    prepared = prepare_mlp_params(params)                      # f32 exact path

    out = jax.block_until_ready(mlp_forward(x, prepared))
    ref = mlp_reference(x, params)
    assert out.shape == (batch, output_dims)
    assert jnp.allclose(out, ref, atol=1e-4, rtol=1e-4), "small-case mismatch"

    # --- case 2: larger shapes -> multi-step batch grid (even step count) ---
    key, kx2, kp2 = jax.random.split(key, 3)
    batch2, in2, out2, hidden2 = 640, 48, 64, (256, 256)
    x2 = jax.random.normal(kx2, (batch2, in2), jnp.float32)
    params2 = init_mlp_params(kp2, in2, out2, hidden2)
    prepared2 = prepare_mlp_params(params2)

    out_big = jax.block_until_ready(mlp_forward(x2, prepared2, block_m=512))
    ref_big = mlp_reference(x2, params2)
    assert out_big.shape == (batch2, out2)
    assert jnp.allclose(out_big, ref_big, atol=1e-4, rtol=1e-4), "large-case mismatch"

    # --- case 3: bf16 MXU fast path (f32 accum), looser tolerance -----------
    prepared_bf16 = prepare_mlp_params(params2, matmul_dtype=jnp.bfloat16)
    out_bf16 = jax.block_until_ready(mlp_forward(x2, prepared_bf16, block_m=512))
    assert out_bf16.shape == (batch2, out2)
    assert jnp.allclose(out_bf16, ref_big, atol=5e-2, rtol=5e-2), "bf16-case mismatch"

    print("KERNEL_OK")
</pallas_src>

<mosaic_0001>
module attributes {stable_mosaic.version = 11 : i64} {
  func.func @kernel(%arg0: i32, %arg1: memref<8x16xf32, #tpu.memory_space<vmem>>, %arg2: memref<16x128xf32, #tpu.memory_space<vmem>>, %arg3: memref<1x128xf32, #tpu.memory_space<vmem>>, %arg4: memref<128x128xf32, #tpu.memory_space<vmem>>, %arg5: memref<1x128xf32, #tpu.memory_space<vmem>>, %arg6: memref<128x128xf32, #tpu.memory_space<vmem>>, %arg7: memref<1x128xf32, #tpu.memory_space<vmem>>, %arg8: memref<8x128xf32, #tpu.memory_space<vmem>>) attributes {dimension_semantics = [#tpu.dimension_semantics<parallel>], iteration_bounds = array<i64: 1>, scalar_prefetch = 0 : i64, scratch_operands = 0 : i64, tpu.core_type = #tpu.core_type<tc>, window_params = [{transform_indices = @transform_0, window_bounds = array<i64: 8, 16>}, {pipeline_mode = #tpu.pipeline_mode<synchronous>, transform_indices = @transform_1, window_bounds = array<i64: 16, 128>}, {pipeline_mode = #tpu.pipeline_mode<synchronous>, transform_indices = @transform_2, window_bounds = array<i64: 1, 128>}, {pipeline_mode = #tpu.pipeline_mode<synchronous>, transform_indices = @transform_3, window_bounds = array<i64: 128, 128>}, {pipeline_mode = #tpu.pipeline_mode<synchronous>, transform_indices = @transform_4, window_bounds = array<i64: 1, 128>}, {pipeline_mode = #tpu.pipeline_mode<synchronous>, transform_indices = @transform_5, window_bounds = array<i64: 128, 128>}, {pipeline_mode = #tpu.pipeline_mode<synchronous>, transform_indices = @transform_6, window_bounds = array<i64: 1, 128>}, {transform_indices = @transform_7, window_bounds = array<i64: 8, 128>}]} {
    %c0 = arith.constant 0 : index
    %c0_0 = arith.constant 0 : index
    %0 = vector.load %arg1[%c0, %c0_0] : memref<8x16xf32, #tpu.memory_space<vmem>>, vector<8x16xf32>
    %c0_1 = arith.constant 0 : index
    %c0_2 = arith.constant 0 : index
    %1 = vector.load %arg2[%c0_1, %c0_2] : memref<16x128xf32, #tpu.memory_space<vmem>>, vector<16x128xf32>
    %cst = arith.constant dense<0.000000e+00> : vector<8x128xf32>
    %2 = tpu.matmul %0, %1, %cst {dimension_numbers = #tpu.dot_dimension_numbers<[1], [0], [0], [1], [0, 0, 1, 1], [], []>} : vector<8x16xf32>, vector<16x128xf32>, vector<8x128xf32> -> vector<8x128xf32>
    %c0_3 = arith.constant 0 : index
    %c0_4 = arith.constant 0 : index
    %3 = vector.load %arg3[%c0_3, %c0_4] : memref<1x128xf32, #tpu.memory_space<vmem>>, vector<1x128xf32>
    %4 = vector.broadcast %3 : vector<1x128xf32> to vector<8x128xf32>
    %5 = arith.addf %2, %4 : vector<8x128xf32>
    %cst_5 = arith.constant 0.000000e+00 : f32
    %6 = vector.broadcast %cst_5 : f32 to vector<8x128xf32>
    %7 = arith.maximumf %5, %6 : vector<8x128xf32>
    %c0_6 = arith.constant 0 : index
    %c0_7 = arith.constant 0 : index
    %8 = vector.load %arg4[%c0_6, %c0_7] : memref<128x128xf32, #tpu.memory_space<vmem>>, vector<128x128xf32>
    %cst_8 = arith.constant dense<0.000000e+00> : vector<8x128xf32>
    %9 = tpu.matmul %7, %8, %cst_8 {dimension_numbers = #tpu.dot_dimension_numbers<[1], [0], [0], [1], [0, 0, 1, 1], [], []>} : vector<8x128xf32>, vector<128x128xf32>, vector<8x128xf32> -> vector<8x128xf32>
    %c0_9 = arith.constant 0 : index
    %c0_10 = arith.constant 0 : index
    %10 = vector.load %arg5[%c0_9, %c0_10] : memref<1x128xf32, #tpu.memory_space<vmem>>, vector<1x128xf32>
    %11 = vector.broadcast %10 : vector<1x128xf32> to vector<8x128xf32>
    %12 = arith.addf %9, %11 : vector<8x128xf32>
    %cst_11 = arith.constant 0.000000e+00 : f32
    %13 = vector.broadcast %cst_11 : f32 to vector<8x128xf32>
    %14 = arith.maximumf %12, %13 : vector<8x128xf32>
    %c0_12 = arith.constant 0 : index
    %c0_13 = arith.constant 0 : index
    %15 = vector.load %arg6[%c0_12, %c0_13] : memref<128x128xf32, #tpu.memory_space<vmem>>, vector<128x128xf32>
    %cst_14 = arith.constant dense<0.000000e+00> : vector<8x128xf32>
    %16 = tpu.matmul %14, %15, %cst_14 {dimension_numbers = #tpu.dot_dimension_numbers<[1], [0], [0], [1], [0, 0, 1, 1], [], []>} : vector<8x128xf32>, vector<128x128xf32>, vector<8x128xf32> -> vector<8x128xf32>
    %c0_15 = arith.constant 0 : index
    %c0_16 = arith.constant 0 : index
    %17 = vector.load %arg7[%c0_15, %c0_16] : memref<1x128xf32, #tpu.memory_space<vmem>>, vector<1x128xf32>
    %18 = vector.broadcast %17 : vector<1x128xf32> to vector<8x128xf32>
    %19 = arith.addf %16, %18 : vector<8x128xf32>
    %c0_17 = arith.constant 0 : index
    %c0_18 = arith.constant 0 : index
    %20 = vector.load %arg8[%c0_17, %c0_18] : memref<8x128xf32, #tpu.memory_space<vmem>>, vector<8x128xf32>
    tpu.vector_store %arg8[%c0_17, %c0_18], %19 {strides = array<i32>} : memref<8x128xf32, #tpu.memory_space<vmem>>, vector<8x128xf32>,
    return
  }
  func.func @transform_0(%arg0: i32) -> (i32, i32) {
    %c0_i32 = arith.constant 0 : i32
    %c0_i32_0 = arith.constant 0 : i32
    return %arg0, %c0_i32 : i32, i32
  }
  func.func @transform_1(%arg0: i32) -> (i32, i32) {
    %c0_i32 = arith.constant 0 : i32
    %c0_i32_0 = arith.constant 0 : i32
    %c0_i32_1 = arith.constant 0 : i32
    return %c0_i32, %c0_i32_0 : i32, i32
  }
  func.func @transform_2(%arg0: i32) -> (i32, i32) {
    %c0_i32 = arith.constant 0 : i32
    %c0_i32_0 = arith.constant 0 : i32
    %c0_i32_1 = arith.constant 0 : i32
    return %c0_i32, %c0_i32_0 : i32, i32
  }
  func.func @transform_3(%arg0: i32) -> (i32, i32) {
    %c0_i32 = arith.constant 0 : i32
    %c0_i32_0 = arith.constant 0 : i32
    %c0_i32_1 = arith.constant 0 : i32
    return %c0_i32, %c0_i32_0 : i32, i32
  }
  func.func @transform_4(%arg0: i32) -> (i32, i32) {
    %c0_i32 = arith.constant 0 : i32
    %c0_i32_0 = arith.constant 0 : i32
    %c0_i32_1 = arith.constant 0 : i32
    return %c0_i32, %c0_i32_0 : i32, i32
  }
  func.func @transform_5(%arg0: i32) -> (i32, i32) {
    %c0_i32 = arith.constant 0 : i32
    %c0_i32_0 = arith.constant 0 : i32
    %c0_i32_1 = arith.constant 0 : i32
    return %c0_i32, %c0_i32_0 : i32, i32
  }
  func.func @transform_6(%arg0: i32) -> (i32, i32) {
    %c0_i32 = arith.constant 0 : i32
    %c0_i32_0 = arith.constant 0 : i32
    %c0_i32_1 = arith.constant 0 : i32
    return %c0_i32, %c0_i32_0 : i32, i32
  }
  func.func @transform_7(%arg0: i32) -> (i32, i32) {
    %c0_i32 = arith.constant 0 : i32
    %c0_i32_0 = arith.constant 0 : i32
    return %arg0, %c0_i32 : i32, i32
  }
}

module attributes {stable_mosaic.version = 11 : i64} {
  func.func @kernel(%arg0: i32, %arg1: memref<8x16xf32, #tpu.memory_space<vmem>>, %arg2: memref<16x128xf32, #tpu.memory_space<vmem>>, %arg3: memref<1x128xf32, #tpu.memory_space<vmem>>, %arg4: memref<128x128xf32, #tpu.memory_space<vmem>>, %arg5: memref<1x128xf32, #tpu.memory_space<vmem>>, %arg6: memref<128x128xf32, #tpu.memory_space<vmem>>, %arg7: memref<1x128xf32, #tpu.memory_space<vmem>>, %arg8: memref<8x128xf32, #tpu.memory_space<vmem>>) attributes {dimension_semantics = [#tpu.dimension_semantics<parallel>], iteration_bounds = array<i64: 1>, scalar_prefetch = 0 : i64, scratch_operands = 0 : i64, tpu.core_type = #tpu.core_type<tc>, window_params = [{transform_indices = @transform_0, window_bounds = array<i64: 8, 16>}, {pipeline_mode = #tpu.pipeline_mode<synchronous>, transform_indices = @transform_1, window_bounds = array<i64: 16, 128>}, {pipeline_mode = #tpu.pipeline_mode<synchronous>, transform_indices = @transform_2, window_bounds = array<i64: 1, 128>}, {pipeline_mode = #tpu.pipeline_mode<synchronous>, transform_indices = @transform_3, window_bounds = array<i64: 128, 128>}, {pipeline_mode = #tpu.pipeline_mode<synchronous>, transform_indices = @transform_4, window_bounds = array<i64: 1, 128>}, {pipeline_mode = #tpu.pipeline_mode<synchronous>, transform_indices = @transform_5, window_bounds = array<i64: 128, 128>}, {pipeline_mode = #tpu.pipeline_mode<synchronous>, transform_indices = @transform_6, window_bounds = array<i64: 1, 128>}, {transform_indices = @transform_7, window_bounds = array<i64: 8, 128>}]} {
    %c0 = arith.constant 0 : index
    %c0_0 = arith.constant 0 : index
    %0 = vector.load %arg1[%c0, %c0_0] : memref<8x16xf32, #tpu.memory_space<vmem>>, vector<8x16xf32>
    %c0_1 = arith.constant 0 : index
    %c0_2 = arith.constant 0 : index
    %1 = vector.load %arg2[%c0_1, %c0_2] : memref<16x128xf32, #tpu.memory_space<vmem>>, vector<16x128xf32>
    %cst = arith.constant dense<0.000000e+00> : vector<8x128xf32>
    %2 = tpu.matmul %0, %1, %cst {dimension_numbers = #tpu.dot_dimension_numbers<[1], [0], [0], [1], [0, 0, 1, 1], [], []>} : vector<8x16xf32>, vector<16x128xf32>, vector<8x128xf32> -> vector<8x128xf32>
    %c0_3 = arith.constant 0 : index
    %c0_4 = arith.constant 0 : index
    %3 = vector.load %arg3[%c0_3, %c0_4] : memref<1x128xf32, #tpu.memory_space<vmem>>, vector<1x128xf32>
    %4 = vector.broadcast %3 : vector<1x128xf32> to vector<8x128xf32>
    %5 = arith.addf %2, %4 : vector<8x128xf32>
    %cst_5 = arith.constant 0.000000e+00 : f32
    %6 = vector.broadcast %cst_5 : f32 to vector<8x128xf32>
    %7 = arith.maximumf %5, %6 : vector<8x128xf32>
    %c0_6 = arith.constant 0 : index
    %c0_7 = arith.constant 0 : index
    %8 = vector.load %arg4[%c0_6, %c0_7] : memref<128x128xf32, #tpu.memory_space<vmem>>, vector<128x128xf32>
    %cst_8 = arith.constant dense<0.000000e+00> : vector<8x128xf32>
    %9 = tpu.matmul %7, %8, %cst_8 {dimension_numbers = #tpu.dot_dimension_numbers<[1], [0], [0], [1], [0, 0, 1, 1], [], []>} : vector<8x128xf32>, vector<128x128xf32>, vector<8x128xf32> -> vector<8x128xf32>
    %c0_9 = arith.constant 0 : index
    %c0_10 = arith.constant 0 : index
    %10 = vector.load %arg5[%c0_9, %c0_10] : memref<1x128xf32, #tpu.memory_space<vmem>>, vector<1x128xf32>
    %11 = vector.broadcast %10 : vector<1x128xf32> to vector<8x128xf32>
    %12 = arith.addf %9, %11 : vector<8x128xf32>
    %cst_11 = arith.constant 0.000000e+00 : f32
    %13 = vector.broadcast %cst_11 : f32 to vector<8x128xf32>
    %14 = arith.maximumf %12, %13 : vector<8x128xf32>
    %c0_12 = arith.constant 0 : index
    %c0_13 = arith.constant 0 : index
    %15 = vector.load %arg6[%c0_12, %c0_13] : memref<128x128xf32, #tpu.memory_space<vmem>>, vector<128x128xf32>
    %cst_14 = arith.constant dense<0.000000e+00> : vector<8x128xf32>
    %16 = tpu.matmul %14, %15, %cst_14 {dimension_numbers = #tpu.dot_dimension_numbers<[1], [0], [0], [1], [0, 0, 1, 1], [], []>} : vector<8x128xf32>, vector<128x128xf32>, vector<8x128xf32> -> vector<8x128xf32>
    %c0_15 = arith.constant 0 : index
    %c0_16 = arith.constant 0 : index
    %17 = vector.load %arg7[%c0_15, %c0_16] : memref<1x128xf32, #tpu.memory_space<vmem>>, vector<1x128xf32>
    %18 = vector.broadcast %17 : vector<1x128xf32> to vector<8x128xf32>
    %19 = arith.addf %16, %18 : vector<8x128xf32>
    %c0_17 = arith.constant 0 : index
    %c0_18 = arith.constant 0 : index
    %20 = vector.load %arg8[%c0_17, %c0_18] : memref<8x128xf32, #tpu.memory_space<vmem>>, vector<8x128xf32>
    tpu.vector_store %arg8[%c0_17, %c0_18], %19 {strides = array<i32>} : memref<8x128xf32, #tpu.memory_space<vmem>>, vector<8x128xf32>,
    return
  }
  func.func @transform_0(%arg0: i32) -> (i32, i32) {
    %c0_i32 = arith.constant 0 : i32
    %c0_i32_0 = arith.constant 0 : i32
    return %arg0, %c0_i32 : i32, i32
  }
  func.func @transform_1(%arg0: i32) -> (i32, i32) {
    %c0_i32 = arith.constant 0 : i32
    %c0_i32_0 = arith.constant 0 : i32
    %c0_i32_1 = arith.constant 0 : i32
    return %c0_i32, %c0_i32_0 : i32, i32
  }
  func.func @transform_2(%arg0: i32) -> (i32, i32) {
    %c0_i32 = arith.constant 0 : i32
    %c0_i32_0 = arith.constant 0 : i32
    %c0_i32_1 = arith.constant 0 : i32
    return %c0_i32, %c0_i32_0 : i32, i32
  }
  func.func @transform_3(%arg0: i32) -> (i32, i32) {
    %c0_i32 = arith.constant 0 : i32
    %c0_i32_0 = arith.constant 0 : i32
    %c0_i32_1 = arith.constant 0 : i32
    return %c0_i32, %c0_i32_0 : i32, i32
  }
  func.func @transform_4(%arg0: i32) -> (i32, i32) {
    %c0_i32 = arith.constant 0 : i32
    %c0_i32_0 = arith.constant 0 : i32
    %c0_i32_1 = arith.constant 0 : i32
    return %c0_i32, %c0_i32_0 : i32, i32
  }
  func.func @transform_5(%arg0: i32) -> (i32, i32) {
    %c0_i32 = arith.constant 0 : i32
    %c0_i32_0 = arith.constant 0 : i32
    %c0_i32_1 = arith.constant 0 : i32
    return %c0_i32, %c0_i32_0 : i32, i32
  }
  func.func @transform_6(%arg0: i32) -> (i32, i32) {
    %c0_i32 = arith.constant 0 : i32
    %c0_i32_0 = arith.constant 0 : i32
    %c0_i32_1 = arith.constant 0 : i32
    return %c0_i32, %c0_i32_0 : i32, i32
  }
  func.func @transform_7(%arg0: i32) -> (i32, i32) {
    %c0_i32 = arith.constant 0 : i32
    %c0_i32_0 = arith.constant 0 : i32
    return %arg0, %c0_i32 : i32, i32
  }
}

</mosaic_0001>

<llo_original>
// kernel: _mlp_forward_padded.1
$region0: #{_mlp_forward_padded.1}
  #allocation0 [shape = 'u32[]', space=smem, size = 0x4, offset = 0x4, fixed_abs, tag = 'smem constant byte address 0x4 - core index']
  #allocation1 [shape = 'u32[72,128]{1,0:T(1,128)}', space=vmem, size = 0x9000, scoped, tag = 'internal scratch']
  %s0 = inlined_call_operand.vmem [shape: f32[8,16], index: 0, kind: input, shape index: {}]
  %s1 = inlined_call_operand.hbm [shape: f32[16,128], index: 1, kind: input, shape index: {}]
  %s2 = inlined_call_operand.vmem [shape: f32[1,128], index: 2, kind: input, shape index: {}]
  %s3 = inlined_call_operand.hbm [shape: f32[128,128], index: 3, kind: input, shape index: {}]
  %s4 = inlined_call_operand.vmem [shape: f32[1,128], index: 4, kind: input, shape index: {}]
  %s5 = inlined_call_operand.hbm [shape: f32[128,128], index: 5, kind: input, shape index: {}]
  %s6 = inlined_call_operand.vmem [shape: f32[1,128], index: 6, kind: input, shape index: {}]
  %s7 = inlined_call_operand.vmem [shape: f32[8,128], index: 7, kind: output, shape index: {}]
  %s8 = sld [smem:[#allocation0]]
  $region50: #{_mlp_forward_padded.1} parent=0
    _
  %s10 = ssub.s32 1, %s8
  %s11 = scalar_select 0, %s10, %s8
  $region1: #{_mlp_forward_padded.1} parent=0
    #allocation2 [shape = 'u8[8192]{0}', space=vmem, size = 0x2000, scoped, tag = 'input window, operand 1, single buffered']
    #allocation3 [shape = 's32[1]{0}', space=sflag, size = 0x4, scoped, tag = 'scoped memory for _mlp_forward_padded.1']
    #allocation4 [shape = 'u8[65536]{0}', space=vmem, size = 0x10000, scoped, tag = 'input window, operand 3, single buffered']
    #allocation5 [shape = 's32[1]{0}', space=sflag, size = 0x4, scoped, tag = 'scoped memory for _mlp_forward_padded.1']
    #allocation6 [shape = 'u8[65536]{0}', space=vmem, size = 0x10000, scoped, tag = 'input window, operand 5, single buffered']
    %12 = vsyncpa [#allocation3], 0
    %13 = vsyncpa [#allocation5], 0
    // Predicated region
    $region2: #{_mlp_forward_padded.1} parent=1 // pred_check
      _
    $region3: #{_mlp_forward_padded.1} parent=1 // pred_check_branch
      %15 = sbr.rel (0) target = $region5
    $region4: #{_mlp_forward_padded.1} parent=1 // pred_region
      _
    $region5: #{_mlp_forward_padded.1} parent=1 // pred_fallthru
      _
    // Predicated region
    $region6: #{_mlp_forward_padded.1} parent=1 // pred_check
      _
    $region7: #{_mlp_forward_padded.1} parent=1 // pred_check_branch
      %17 = sbr.rel (0) target = $region9
    $region8: #{_mlp_forward_padded.1} parent=1 // pred_region
      %19 = vsyncadd [#allocation3], 0
      %s20 = sshll.u32 %s1, 4
      %s21 = int_to_ptr.hbm [resolvable:$true] %s20
      %s22 = sshll.u32 [#allocation2], 4
      %s23 = int_to_ptr.vmem [resolvable:$true] %s22
      %28 = dma.hbm_to_vmem [thread:$0]  %s21, 256, %s23, [#allocation3], 128, 128, 8
    $region9: #{_mlp_forward_padded.1} parent=1 // pred_fallthru
      _
    // Predicated region
    $region10: #{_mlp_forward_padded.1} parent=1 // pred_check
      _
    $region11: #{_mlp_forward_padded.1} parent=1 // pred_check_branch
      %30 = sbr.rel (0) target = $region13
    $region12: #{_mlp_forward_padded.1} parent=1 // pred_region
      _
    $region13: #{_mlp_forward_padded.1} parent=1 // pred_fallthru
      _
    // Predicated region
    $region14: #{_mlp_forward_padded.1} parent=1 // pred_check
      _
    $region15: #{_mlp_forward_padded.1} parent=1 // pred_check_branch
      %32 = sbr.rel (0) target = $region17
    $region16: #{_mlp_forward_padded.1} parent=1 // pred_region
      %34 = vsyncadd [#allocation5], 0
      %s35 = sshll.u32 %s3, 4
      %s36 = int_to_ptr.hbm [resolvable:$true] %s35
      %s37 = sshll.u32 [#allocation4], 4
      %s38 = int_to_ptr.vmem [resolvable:$true] %s37
      %43 = dma.hbm_to_vmem [thread:$0]  %s36, 2048, %s38, [#allocation5], 128, 128, 8
    $region17: #{_mlp_forward_padded.1} parent=1 // pred_fallthru
      _
    // Predicated region
    $region18: #{_mlp_forward_padded.1} parent=1 // pred_check
      _
    $region19: #{_mlp_forward_padded.1} parent=1 // pred_check_branch
      %45 = sbr.rel (0) target = $region21
    $region20: #{_mlp_forward_padded.1} parent=1 // pred_region
      _
    $region21: #{_mlp_forward_padded.1} parent=1 // pred_fallthru
      _
    // Predicated region
    $region22: #{_mlp_forward_padded.1} parent=1 // pred_check
      _
    $region23: #{_mlp_forward_padded.1} parent=1 // pred_check_branch
      %47 = sbr.rel (0) target = $region25
    $region24: #{_mlp_forward_padded.1} parent=1 // pred_region
      %49 = vsyncadd [#allocation5], 0
      %s50 = sshll.u32 %s5, 4
      %s51 = int_to_ptr.hbm [resolvable:$true] %s50
      %s52 = sshll.u32 [#allocation6], 4
      %s53 = int_to_ptr.vmem [resolvable:$true] %s52
      %58 = dma.hbm_to_vmem [thread:$0]  %s51, 2048, %s53, [#allocation5], 128, 128, 8
    $region25: #{_mlp_forward_padded.1} parent=1 // pred_fallthru
      _
    // Predicated region
    $region26: #{_mlp_forward_padded.1} parent=1 // pred_check
      _
    $region27: #{_mlp_forward_padded.1} parent=1 // pred_check_branch
      %60 = sbr.rel (0) target = $region29
    $region28: #{_mlp_forward_padded.1} parent=1 // pred_region
      _
    $region29: #{_mlp_forward_padded.1} parent=1 // pred_fallthru
      _
    // Predicated region
    $region30: #{_mlp_forward_padded.1} parent=1 // pred_check
      _
    $region31: #{_mlp_forward_padded.1} parent=1 // pred_check_branch
      %62 = sbr.rel (0) target = $region33
    $region32: #{_mlp_forward_padded.1} parent=1 // pred_region
      %64 = dma.done [#allocation3], 256
    $region33: #{_mlp_forward_padded.1} parent=1 // pred_fallthru
      _
    // Predicated region
    $region34: #{_mlp_forward_padded.1} parent=1 // pred_check
      _
    $region35: #{_mlp_forward_padded.1} parent=1 // pred_check_branch
      %66 = sbr.rel (0) target = $region37
    $region36: #{_mlp_forward_padded.1} parent=1 // pred_region
      %68 = dma.done [#allocation5], 2048
    $region37: #{_mlp_forward_padded.1} parent=1 // pred_fallthru
      _
    // Predicated region
    $region38: #{_mlp_forward_padded.1} parent=1 // pred_check
      _
    $region39: #{_mlp_forward_padded.1} parent=1 // pred_check_branch
      %70 = sbr.rel (0) target = $region41
    $region40: #{_mlp_forward_padded.1} parent=1 // pred_region
      %72 = dma.done [#allocation5], 2048
    $region41: #{_mlp_forward_padded.1} parent=1 // pred_fallthru
      _
    %v73 = vld [vmem:[%s0] sm:$0xff]
    %v74 = vld [vmem:[#allocation2] sm:$0xff]
    %v75 = vld [vmem:[#allocation2 + $0x8] sm:$0xff]
    %v76 = vld [vmem:[%s2] sm:$0x1]
    %v78 = vperm.slane %v76, 0
    %vm80 = vcmask 130048
    %v82 = vsel %vm80, %v73, 0
    %84 = vmatpush.msra.mxu0 0.0
    %85 = vmatpush.msra.mxu0 0.0
    %86 = vmatpush.msra.mxu0 0.0
    %87 = vmatpush.msra.mxu0 0.0
    %88 = vmatpush.msra.mxu0 0.0
    %89 = vmatpush.msra.mxu0 0.0
    %90 = vmatpush.msra.mxu0 0.0
    %91 = vmatpush.msra.mxu0 0.0
    %92 = vmatpush.msra.mxu0 0.0
    %93 = vmatpush.msra.mxu0 0.0
    %94 = vmatpush.msra.mxu0 0.0
    %95 = vmatpush.msra.mxu0 0.0
    %96 = vmatpush.msra.mxu0 0.0
    %97 = vmatpush.msra.mxu0 0.0
    %98 = vmatpush.msra.mxu0 %v75
    %99 = vmatpush.msra.mxu0 %v74
    %100 = vmatmul.f32.gmra.mxu0 %v82
    %v101 = vpop.f32.mrf.mxu0
    %v102 = vadd.f32 %v78, %v101
    %103 = vdwg.mxu0
    %v104 = vmax.f32 %v102, 0.0
    %v105 = vld [vmem:[#allocation4] sm:$0xff]
    %v106 = vld [vmem:[#allocation4 + $0x8] sm:$0xff]
    %v107 = vld [vmem:[#allocation4 + $0x10] sm:$0xff]
    %v108 = vld [vmem:[#allocation4 + $0x18] sm:$0xff]
    %v109 = vld [vmem:[#allocation4 + $0x20] sm:$0xff]
    %v110 = vld [vmem:[#allocation4 + $0x28] sm:$0xff]
    %v111 = vld [vmem:[#allocation4 + $0x30] sm:$0xff]
    %v112 = vld [vmem:[#allocation4 + $0x38] sm:$0xff]
    %v113 = vld [vmem:[#allocation4 + $0x40] sm:$0xff]
    %v114 = vld [vmem:[#allocation4 + $0x48] sm:$0xff]
    %v115 = vld [vmem:[#allocation4 + $0x50] sm:$0xff]
    %v116 = vld [vmem:[#allocation4 + $0x58] sm:$0xff]
    %v117 = vld [vmem:[#allocation4 + $0x60] sm:$0xff]
    %v118 = vld [vmem:[#allocation4 + $0x68] sm:$0xff]
    %v119 = vld [vmem:[#allocation4 + $0x70] sm:$0xff]
    %v120 = vld [vmem:[#allocation4 + $0x78] sm:$0xff]
    %v121 = vld [vmem:[%s4] sm:$0x1]
    %v123 = vperm.slane %v121, 0
    %125 = vmatpush.msra.mxu0 %v120
    %126 = vmatpush.msra.mxu0 %v119
    %127 = vmatpush.msra.mxu0 %v118
    %128 = vmatpush.msra.mxu0 %v117
    %129 = vmatpush.msra.mxu0 %v116
    %130 = vmatpush.msra.mxu0 %v115
    %131 = vmatpush.msra.mxu0 %v114
    %132 = vmatpush.msra.mxu0 %v113
    %133 = vmatpush.msra.mxu0 %v112
    %134 = vmatpush.msra.mxu0 %v111
    %135 = vmatpush.msra.mxu0 %v110
    %136 = vmatpush.msra.mxu0 %v109
    %137 = vmatpush.msra.mxu0 %v108
    %138 = vmatpush.msra.mxu0 %v107
    %139 = vmatpush.msra.mxu0 %v106
    %140 = vmatpush.msra.mxu0 %v105
    %141 = vmatmul.f32.gmra.mxu0 %v104
    %v142 = vpop.f32.mrf.mxu0
    %v143 = vadd.f32 %v123, %v142
    %144 = vdwg.mxu0
    %v145 = vmax.f32 %v143, 0.0
    %v146 = vld [vmem:[#allocation6] sm:$0xff]
    %v147 = vld [vmem:[#allocation6 + $0x8] sm:$0xff]
    %v148 = vld [vmem:[#allocation6 + $0x10] sm:$0xff]
    %v149 = vld [vmem:[#allocation6 + $0x18] sm:$0xff]
    %v150 = vld [vmem:[#allocation6 + $0x20] sm:$0xff]
    %v151 = vld [vmem:[#allocation6 + $0x28] sm:$0xff]
    %v152 = vld [vmem:[#allocation6 + $0x30] sm:$0xff]
    %v153 = vld [vmem:[#allocation6 + $0x38] sm:$0xff]
    %v154 = vld [vmem:[#allocation6 + $0x40] sm:$0xff]
    %v155 = vld [vmem:[#allocation6 + $0x48] sm:$0xff]
    %v156 = vld [vmem:[#allocation6 + $0x50] sm:$0xff]
    %v157 = vld [vmem:[#allocation6 + $0x58] sm:$0xff]
    %v158 = vld [vmem:[#allocation6 + $0x60] sm:$0xff]
    %v159 = vld [vmem:[#allocation6 + $0x68] sm:$0xff]
    %v160 = vld [vmem:[#allocation6 + $0x70] sm:$0xff]
    %v161 = vld [vmem:[#allocation6 + $0x78] sm:$0xff]
    %v162 = vld [vmem:[%s6] sm:$0x1]
    %v164 = vperm.slane %v162, 0
    %166 = vmatpush.msra.mxu0 %v161
    %167 = vmatpush.msra.mxu0 %v160
    %168 = vmatpush.msra.mxu0 %v159
    %169 = vmatpush.msra.mxu0 %v158
    %170 = vmatpush.msra.mxu0 %v157
    %171 = vmatpush.msra.mxu0 %v156
    %172 = vmatpush.msra.mxu0 %v155
    %173 = vmatpush.msra.mxu0 %v154
    %174 = vmatpush.msra.mxu0 %v153
    %175 = vmatpush.msra.mxu0 %v152
    %176 = vmatpush.msra.mxu0 %v151
    %177 = vmatpush.msra.mxu0 %v150
    %178 = vmatpush.msra.mxu0 %v149
    %179 = vmatpush.msra.mxu0 %v148
    %180 = vmatpush.msra.mxu0 %v147
    %181 = vmatpush.msra.mxu0 %v146
    %182 = vmatmul.f32.gmra.mxu0 %v145
    %v183 = vpop.f32.mrf.mxu0
    %v184 = vadd.f32 %v164, %v183
    %185 = vdwg.mxu0
    %186 = vst [vmem:[%s7] sm:$0xff] %v184
    // Predicated region
    $region42: #{_mlp_forward_padded.1} parent=1 // pred_check
      _
    $region43: #{_mlp_forward_padded.1} parent=1 // pred_check_branch
      %188 = sbr.rel (0) target = $region45
    $region44: #{_mlp_forward_padded.1} parent=1 // pred_region
      _
    $region45: #{_mlp_forward_padded.1} parent=1 // pred_fallthru
      _
    // Predicated region
    $region46: #{_mlp_forward_padded.1} parent=1 // pred_check
      _
    $region47: #{_mlp_forward_padded.1} parent=1 // pred_check_branch
      %190 = sbr.rel (0) target = $region49
    $region48: #{_mlp_forward_padded.1} parent=1 // pred_region
      _
    $region49: #{_mlp_forward_padded.1} parent=1 // pred_fallthru
      _
    %191 = vsyncpa [#allocation3], 1
    %192 = vsyncpa [#allocation5], 1

// kernel: _mlp_forward_padded.1
$region0: #{_mlp_forward_padded.1}
  #allocation0 [shape = 'u32[]', space=smem, size = 0x4, offset = 0x4, fixed_abs, tag = 'smem constant byte address 0x4 - core index']
  #allocation1 [shape = 'u32[72,128]{1,0:T(1,128)}', space=vmem, size = 0x9000, scoped, tag = 'internal scratch']
  %s0 = inlined_call_operand.vmem [shape: f32[8,16], index: 0, kind: input, shape index: {}]
  %s1 = inlined_call_operand.hbm [shape: f32[16,128], index: 1, kind: input, shape index: {}]
  %s2 = inlined_call_operand.vmem [shape: f32[1,128], index: 2, kind: input, shape index: {}]
  %s3 = inlined_call_operand.hbm [shape: f32[128,128], index: 3, kind: input, shape index: {}]
  %s4 = inlined_call_operand.vmem [shape: f32[1,128], index: 4, kind: input, shape index: {}]
  %s5 = inlined_call_operand.hbm [shape: f32[128,128], index: 5, kind: input, shape index: {}]
  %s6 = inlined_call_operand.vmem [shape: f32[1,128], index: 6, kind: input, shape index: {}]
  %s7 = inlined_call_operand.vmem [shape: f32[8,128], index: 7, kind: output, shape index: {}]
  %s8 = sld [smem:[#allocation0]]
  $region50: #{_mlp_forward_padded.1} parent=0
    _
  %s10 = ssub.s32 1, %s8
  %s11 = scalar_select 0, %s10, %s8
  $region1: #{_mlp_forward_padded.1} parent=0
    #allocation2 [shape = 'u8[8192]{0}', space=vmem, size = 0x2000, scoped, tag = 'input window, operand 1, single buffered']
    #allocation3 [shape = 's32[1]{0}', space=sflag, size = 0x4, scoped, tag = 'scoped memory for _mlp_forward_padded.1']
    #allocation4 [shape = 'u8[65536]{0}', space=vmem, size = 0x10000, scoped, tag = 'input window, operand 3, single buffered']
    #allocation5 [shape = 's32[1]{0}', space=sflag, size = 0x4, scoped, tag = 'scoped memory for _mlp_forward_padded.1']
    #allocation6 [shape = 'u8[65536]{0}', space=vmem, size = 0x10000, scoped, tag = 'input window, operand 5, single buffered']
    %12 = vsyncpa [#allocation3], 0
    %13 = vsyncpa [#allocation5], 0
    // Predicated region
    $region2: #{_mlp_forward_padded.1} parent=1 // pred_check
      _
    $region3: #{_mlp_forward_padded.1} parent=1 // pred_check_branch
      %15 = sbr.rel (0) target = $region5
    $region4: #{_mlp_forward_padded.1} parent=1 // pred_region
      _
    $region5: #{_mlp_forward_padded.1} parent=1 // pred_fallthru
      _
    // Predicated region
    $region6: #{_mlp_forward_padded.1} parent=1 // pred_check
      _
    $region7: #{_mlp_forward_padded.1} parent=1 // pred_check_branch
      %17 = sbr.rel (0) target = $region9
    $region8: #{_mlp_forward_padded.1} parent=1 // pred_region
      %19 = vsyncadd [#allocation3], 0
      %s20 = sshll.u32 %s1, 4
      %s21 = int_to_ptr.hbm [resolvable:$true] %s20
      %s22 = sshll.u32 [#allocation2], 4
      %s23 = int_to_ptr.vmem [resolvable:$true] %s22
      %28 = dma.hbm_to_vmem [thread:$0]  %s21, 256, %s23, [#allocation3], 128, 128, 8
    $region9: #{_mlp_forward_padded.1} parent=1 // pred_fallthru
      _
    // Predicated region
    $region10: #{_mlp_forward_padded.1} parent=1 // pred_check
      _
    $region11: #{_mlp_forward_padded.1} parent=1 // pred_check_branch
      %30 = sbr.rel (0) target = $region13
    $region12: #{_mlp_forward_padded.1} parent=1 // pred_region
      _
    $region13: #{_mlp_forward_padded.1} parent=1 // pred_fallthru
      _
    // Predicated region
    $region14: #{_mlp_forward_padded.1} parent=1 // pred_check
      _
    $region15: #{_mlp_forward_padded.1} parent=1 // pred_check_branch
      %32 = sbr.rel (0) target = $region17
    $region16: #{_mlp_forward_padded.1} parent=1 // pred_region
      %34 = vsyncadd [#allocation5], 0
      %s35 = sshll.u32 %s3, 4
      %s36 = int_to_ptr.hbm [resolvable:$true] %s35
      %s37 = sshll.u32 [#allocation4], 4
      %s38 = int_to_ptr.vmem [resolvable:$true] %s37
      %43 = dma.hbm_to_vmem [thread:$0]  %s36, 2048, %s38, [#allocation5], 128, 128, 8
    $region17: #{_mlp_forward_padded.1} parent=1 // pred_fallthru
      _
    // Predicated region
    $region18: #{_mlp_forward_padded.1} parent=1 // pred_check
      _
    $region19: #{_mlp_forward_padded.1} parent=1 // pred_check_branch
      %45 = sbr.rel (0) target = $region21
    $region20: #{_mlp_forward_padded.1} parent=1 // pred_region
      _
    $region21: #{_mlp_forward_padded.1} parent=1 // pred_fallthru
      _
    // Predicated region
    $region22: #{_mlp_forward_padded.1} parent=1 // pred_check
      _
    $region23: #{_mlp_forward_padded.1} parent=1 // pred_check_branch
      %47 = sbr.rel (0) target = $region25
    $region24: #{_mlp_forward_padded.1} parent=1 // pred_region
      %49 = vsyncadd [#allocation5], 0
      %s50 = sshll.u32 %s5, 4
      %s51 = int_to_ptr.hbm [resolvable:$true] %s50
      %s52 = sshll.u32 [#allocation6], 4
      %s53 = int_to_ptr.vmem [resolvable:$true] %s52
      %58 = dma.hbm_to_vmem [thread:$0]  %s51, 2048, %s53, [#allocation5], 128, 128, 8
    $region25: #{_mlp_forward_padded.1} parent=1 // pred_fallthru
      _
    // Predicated region
    $region26: #{_mlp_forward_padded.1} parent=1 // pred_check
      _
    $region27: #{_mlp_forward_padded.1} parent=1 // pred_check_branch
      %60 = sbr.rel (0) target = $region29
    $region28: #{_mlp_forward_padded.1} parent=1 // pred_region
      _
    $region29: #{_mlp_forward_padded.1} parent=1 // pred_fallthru
      _
    // Predicated region
    $region30: #{_mlp_forward_padded.1} parent=1 // pred_check
      _
    $region31: #{_mlp_forward_padded.1} parent=1 // pred_check_branch
      %62 = sbr.rel (0) target = $region33
    $region32: #{_mlp_forward_padded.1} parent=1 // pred_region
      %64 = dma.done [#allocation3], 256
    $region33: #{_mlp_forward_padded.1} parent=1 // pred_fallthru
      _
    // Predicated region
    $region34: #{_mlp_forward_padded.1} parent=1 // pred_check
      _
    $region35: #{_mlp_forward_padded.1} parent=1 // pred_check_branch
      %66 = sbr.rel (0) target = $region37
    $region36: #{_mlp_forward_padded.1} parent=1 // pred_region
      %68 = dma.done [#allocation5], 2048
    $region37: #{_mlp_forward_padded.1} parent=1 // pred_fallthru
      _
    // Predicated region
    $region38: #{_mlp_forward_padded.1} parent=1 // pred_check
      _
    $region39: #{_mlp_forward_padded.1} parent=1 // pred_check_branch
      %70 = sbr.rel (0) target = $region41
    $region40: #{_mlp_forward_padded.1} parent=1 // pred_region
      %72 = dma.done [#allocation5], 2048
    $region41: #{_mlp_forward_padded.1} parent=1 // pred_fallthru
      _
    %v73 = vld [vmem:[%s0] sm:$0xff]
    %v74 = vld [vmem:[#allocation2] sm:$0xff]
    %v75 = vld [vmem:[#allocation2 + $0x8] sm:$0xff]
    %v76 = vld [vmem:[%s2] sm:$0x1]
    %v78 = vperm.slane %v76, 0
    %vm80 = vcmask 130048
    %v82 = vsel %vm80, %v73, 0
    %84 = vmatpush.msra.mxu0 0.0
    %85 = vmatpush.msra.mxu0 0.0
    %86 = vmatpush.msra.mxu0 0.0
    %87 = vmatpush.msra.mxu0 0.0
    %88 = vmatpush.msra.mxu0 0.0
    %89 = vmatpush.msra.mxu0 0.0
    %90 = vmatpush.msra.mxu0 0.0
    %91 = vmatpush.msra.mxu0 0.0
    %92 = vmatpush.msra.mxu0 0.0
    %93 = vmatpush.msra.mxu0 0.0
    %94 = vmatpush.msra.mxu0 0.0
    %95 = vmatpush.msra.mxu0 0.0
    %96 = vmatpush.msra.mxu0 0.0
    %97 = vmatpush.msra.mxu0 0.0
    %98 = vmatpush.msra.mxu0 %v75
    %99 = vmatpush.msra.mxu0 %v74
    %100 = vmatmul.f32.gmra.mxu0 %v82
    %v101 = vpop.f32.mrf.mxu0
    %v102 = vadd.f32 %v78, %v101
    %103 = vdwg.mxu0
    %v104 = vmax.f32 %v102, 0.0
    %v105 = vld [vmem:[#allocation4] sm:$0xff]
    %v106 = vld [vmem:[#allocation4 + $0x8] sm:$0xff]
    %v107 = vld [vmem:[#allocation4 + $0x10] sm:$0xff]
    %v108 = vld [vmem:[#allocation4 + $0x18] sm:$0xff]
    %v109 = vld [vmem:[#allocation4 + $0x20] sm:$0xff]
    %v110 = vld [vmem:[#allocation4 + $0x28] sm:$0xff]
    %v111 = vld [vmem:[#allocation4 + $0x30] sm:$0xff]
    %v112 = vld [vmem:[#allocation4 + $0x38] sm:$0xff]
    %v113 = vld [vmem:[#allocation4 + $0x40] sm:$0xff]
    %v114 = vld [vmem:[#allocation4 + $0x48] sm:$0xff]
    %v115 = vld [vmem:[#allocation4 + $0x50] sm:$0xff]
    %v116 = vld [vmem:[#allocation4 + $0x58] sm:$0xff]
    %v117 = vld [vmem:[#allocation4 + $0x60] sm:$0xff]
    %v118 = vld [vmem:[#allocation4 + $0x68] sm:$0xff]
    %v119 = vld [vmem:[#allocation4 + $0x70] sm:$0xff]
    %v120 = vld [vmem:[#allocation4 + $0x78] sm:$0xff]
    %v121 = vld [vmem:[%s4] sm:$0x1]
    %v123 = vperm.slane %v121, 0
    %125 = vmatpush.msra.mxu0 %v120
    %126 = vmatpush.msra.mxu0 %v119
    %127 = vmatpush.msra.mxu0 %v118
    %128 = vmatpush.msra.mxu0 %v117
    %129 = vmatpush.msra.mxu0 %v116
    %130 = vmatpush.msra.mxu0 %v115
    %131 = vmatpush.msra.mxu0 %v114
    %132 = vmatpush.msra.mxu0 %v113
    %133 = vmatpush.msra.mxu0 %v112
    %134 = vmatpush.msra.mxu0 %v111
    %135 = vmatpush.msra.mxu0 %v110
    %136 = vmatpush.msra.mxu0 %v109
    %137 = vmatpush.msra.mxu0 %v108
    %138 = vmatpush.msra.mxu0 %v107
    %139 = vmatpush.msra.mxu0 %v106
    %140 = vmatpush.msra.mxu0 %v105
    %141 = vmatmul.f32.gmra.mxu0 %v104
    %v142 = vpop.f32.mrf.mxu0
    %v143 = vadd.f32 %v123, %v142
    %144 = vdwg.mxu0
    %v145 = vmax.f32 %v143, 0.0
    %v146 = vld [vmem:[#allocation6] sm:$0xff]
    %v147 = vld [vmem:[#allocation6 + $0x8] sm:$0xff]
    %v148 = vld [vmem:[#allocation6 + $0x10] sm:$0xff]
    %v149 = vld [vmem:[#allocation6 + $0x18] sm:$0xff]
    %v150 = vld [vmem:[#allocation6 + $0x20] sm:$0xff]
    %v151 = vld [vmem:[#allocation6 + $0x28] sm:$0xff]
    %v152 = vld [vmem:[#allocation6 + $0x30] sm:$0xff]
    %v153 = vld [vmem:[#allocation6 + $0x38] sm:$0xff]
    %v154 = vld [vmem:[#allocation6 + $0x40] sm:$0xff]
    %v155 = vld [vmem:[#allocation6 + $0x48] sm:$0xff]
    %v156 = vld [vmem:[#allocation6 + $0x50] sm:$0xff]
    %v157 = vld [vmem:[#allocation6 + $0x58] sm:$0xff]
    %v158 = vld [vmem:[#allocation6 + $0x60] sm:$0xff]
    %v159 = vld [vmem:[#allocation6 + $0x68] sm:$0xff]
    %v160 = vld [vmem:[#allocation6 + $0x70] sm:$0xff]
    %v161 = vld [vmem:[#allocation6 + $0x78] sm:$0xff]
    %v162 = vld [vmem:[%s6] sm:$0x1]
    %v164 = vperm.slane %v162, 0
    %166 = vmatpush.msra.mxu0 %v161
    %167 = vmatpush.msra.mxu0 %v160
    %168 = vmatpush.msra.mxu0 %v159
    %169 = vmatpush.msra.mxu0 %v158
    %170 = vmatpush.msra.mxu0 %v157
    %171 = vmatpush.msra.mxu0 %v156
    %172 = vmatpush.msra.mxu0 %v155
    %173 = vmatpush.msra.mxu0 %v154
    %174 = vmatpush.msra.mxu0 %v153
    %175 = vmatpush.msra.mxu0 %v152
    %176 = vmatpush.msra.mxu0 %v151
    %177 = vmatpush.msra.mxu0 %v150
    %178 = vmatpush.msra.mxu0 %v149
    %179 = vmatpush.msra.mxu0 %v148
    %180 = vmatpush.msra.mxu0 %v147
    %181 = vmatpush.msra.mxu0 %v146
    %182 = vmatmul.f32.gmra.mxu0 %v145
    %v183 = vpop.f32.mrf.mxu0
    %v184 = vadd.f32 %v164, %v183
    %185 = vdwg.mxu0
    %186 = vst [vmem:[%s7] sm:$0xff] %v184
    // Predicated region
    $region42: #{_mlp_forward_padded.1} parent=1 // pred_check
      _
    $region43: #{_mlp_forward_padded.1} parent=1 // pred_check_branch
      %188 = sbr.rel (0) target = $region45
    $region44: #{_mlp_forward_padded.1} parent=1 // pred_region
      _
    $region45: #{_mlp_forward_padded.1} parent=1 // pred_fallthru
      _
    // Predicated region
    $region46: #{_mlp_forward_padded.1} parent=1 // pred_check
      _
    $region47: #{_mlp_forward_padded.1} parent=1 // pred_check_branch
      %190 = sbr.rel (0) target = $region49
    $region48: #{_mlp_forward_padded.1} parent=1 // pred_region
      _
    $region49: #{_mlp_forward_padded.1} parent=1 // pred_fallthru
      _
    %191 = vsyncpa [#allocation3], 1
    %192 = vsyncpa [#allocation5], 1

</llo_original>
